<compile_context>
chip_gen: v7x
topology: tpu7x:2x2x1
jax: 0.10.0
libtpu: 0.0.40
codegen_flags: <defaults>
</compile_context>

<pallas_src>
from collections import OrderedDict

import numpy as np
import jax
import jax.numpy as jnp
from jax import lax
from jax.experimental import pallas as pl
from jax.experimental.pallas import tpu as pltpu


def _round_up(x, m):
    return ((x + m - 1) // m) * m


def _pick_sub_block(Bb, PLp):
    """Largest of {32,16,8} that divides Bb and keeps an (SB,PLp) f32 tile small
    enough that the serial-loop live set fits the 64-vreg file."""
    for sb in (32, 16, 8):
        if Bb % sb == 0 and sb * PLp <= 32 * 128:
            return sb
    return 8


def _pick_chunk_tokens(T, Bb, target_rows=256):
    """Phase-1 matmul chunk size in tokens (chunk rows ~= target_rows)."""
    tc = max(1, min(T, target_rows // max(Bb, 1)))
    while T % tc != 0:
        tc -= 1
    return max(tc, 1)


def _make_sopa_kernel(T, Bb, PLp, SB, tc, slab_dtype):
    """T tokens/doc, Bb docs per batch block, PLp=(P*L) lane-padded to 128,
    SB recurrence sub-block rows, tc tokens per phase-1 matmul chunk."""
    CR = tc * Bb                     # rows per phase-1 chunk
    n_chunks = T // tc
    n_sub = Bb // SB

    def kernel(emb_ref, lens_ref, w_ref, b_ref, eps_ref, restart_ref,
               w1_ref, b1_ref, w2_ref, b2_ref, out_ref, trans_ref):
        # --- phase 1: fused lane-dense transition matmul, chunked stores ----
        # trans = relu(emb @ [diag_sl || diag_mp_masked] + bias) written
        # directly into one (T*Bb, 2*PLp) slab; each half is a dense 128-lane
        # tile group so the per-token reads below are full, unmasked loads.
        bias_row = b_ref[...]                                   # (1, 2*PLp)

        def p1(c, _):
            row = pl.multiple_of(c * CR, CR)
            x = emb_ref[pl.ds(row, CR), :]
            tr = jnp.maximum(
                jnp.dot(x, w_ref[...], preferred_element_type=jnp.float32)
                + bias_row, 0.0)
            trans_ref[pl.ds(row, CR), :] = tr.astype(slab_dtype)
            return 0

        lax.fori_loop(0, n_chunks, p1, 0, unroll=(n_chunks <= 8))

        # --- hoisted loop invariants (shared by all sub-blocks) --------------
        eps_b = jnp.broadcast_to(eps_ref[...], (SB, PLp))        # pre-relu'd, mask-folded
        restart_b = jnp.broadcast_to(restart_ref[...], (SB, PLp))

        # --- phase 2: serial soft-pattern recurrence (roll / mul / max) ------
        # run per SB-row sub-block so hiddens/run/eps/restart/len + temporaries
        # stay inside the 64-vreg file (no per-token spills).
        for sb in range(n_sub):
            row0 = sb * SB
            len_col = jnp.broadcast_to(lens_ref[pl.ds(row0, SB), :], (SB, PLp))
            hiddens0 = restart_b                                 # semiring.one at state 0
            run0 = jnp.zeros((SB, PLp), jnp.float32)             # deferred end-state max

            def step(t, carry, row0=row0, len_col=len_col):
                hiddens, run_end = carry
                row = pl.multiple_of(t * Bb + row0, SB)
                tm_sl = trans_ref[pl.ds(row, SB), :PLp].astype(jnp.float32)
                tm_mp = trans_ref[pl.ds(row, SB), PLp:].astype(jnp.float32)

                # epsilon transitions (mask folded into eps): plus(h, shift(h*eps))
                after_eps = jnp.maximum(
                    hiddens, pltpu.roll(hiddens * eps_b, 1, axis=1))
                # main-path transitions (mask folded into weights/bias) + restart=1
                after_main = pltpu.roll(after_eps * tm_mp, 1, axis=1) + restart_b
                # self-loop transitions (self_loop_scale == semiring.one == 1.0)
                new_hiddens = jnp.maximum(after_main, after_eps * tm_sl)

                # deferred end-state reduction over active tokens only
                # (all values >= 0 thanks to relu + restart=1).
                new_run = jnp.maximum(
                    run_end, jnp.where(len_col > t, new_hiddens, 0.0))
                return new_hiddens, new_run

            unroll = True if T <= 16 else 4
            _, run_end = lax.fori_loop(0, T, step, (hiddens0, run0),
                                       unroll=unroll)

            # --- phase 3: end-state-folded, lane-padded MLP head -------------
            h = jnp.maximum(
                jnp.dot(run_end, w1_ref[...], preferred_element_type=jnp.float32)
                + b1_ref[...], 0.0)
            out_ref[pl.ds(row0, SB), :] = (
                jnp.dot(h, w2_ref[...], preferred_element_type=jnp.float32)
                + b2_ref[...])

    return kernel


def sopa_forward_pallas(emb, doc_lens, diags, bias, epsilon, end_states,
                        w1, b1, w2, b2, bias_scale, *,
                        batch_block=128, trans_dtype=jnp.float32,
                        slab_dtype=None):
    """emb: (B, T, D); diags: (P, 2, L, D); bias: (P, 2, L); epsilon: (P, L-1).

    trans_dtype=jnp.bfloat16 (optionally slab_dtype=jnp.bfloat16) is recommended
    on v5e/v6e/v7x at production shapes: MXU-native rate, half the emb/slab
    bytes. The recurrence math stays f32 regardless. Default f32 keeps this
    demo numerically tight against the f32 reference.
    """
    B, T, D = emb.shape
    P, num_diags, L, _ = diags.shape
    assert num_diags == 2
    if slab_dtype is None:
        slab_dtype = trans_dtype
    PL = P * L
    PLp = _round_up(PL, 128)                     # lane-pad pattern*state axis
    H = w1.shape[1]
    C = w2.shape[1]
    Hp = _round_up(H, 128)
    Cp = _round_up(C, 128)

    # --- batch blocking (>=2 blocks when possible so v7x's 2 TCs both work) --
    B8 = _round_up(B, 8)
    Bb = max(8, min(_round_up(batch_block, 8), B8))
    if B8 > 8 and B8 // Bb < 2:
        Bb = _round_up(pl.cdiv(B8, 2), 8)
    G = pl.cdiv(B8, Bb)
    Bpad = G * Bb
    SB = _pick_sub_block(Bb, PLp)
    tc = _pick_chunk_tokens(T, Bb)

    # --- glue: layout plumbing only ------------------------------------------
    # time-major, batch-blocked embeddings: emb_g[g, t*Bb + b_local, :]
    emb_tm = jnp.transpose(emb, (1, 0, 2)).astype(jnp.float32)          # (T, B, D)
    emb_pad = jnp.zeros((T, Bpad, D), jnp.float32).at[:, :B, :].set(emb_tm)
    emb_g = (emb_pad.reshape(T, G, Bb, D).transpose(1, 0, 2, 3)
             .reshape(G, T * Bb, D).astype(trans_dtype))

    # per-row doc lengths (padded rows get 0 => never active)
    lens_pad = jnp.zeros((Bpad,), jnp.int32).at[:B].set(doc_lens.astype(jnp.int32))
    lens_g = lens_pad.reshape(G, Bb, 1)

    # shift-mask fold: a rolled *destination* lane is valid iff it is a real
    # (non-pad) lane and not a pattern-restart lane; pre-zero the source
    # columns that feed invalid destinations (incl. the lane-0 wrap-around).
    k = np.arange(PLp)
    dest = (k + 1) % PLp
    dest_valid = ((dest < PL) & (dest % L != 0)).astype(np.float32)     # (PLp,)
    dv = jnp.asarray(dest_valid[:PL], jnp.float32)
    restart = ((k < PL) & (k % L == 0)).astype(np.float32).reshape(1, PLp)

    # fused (self-loop || main-path) transition weights, bias_scale pre-folded
    d0 = diags[:, 0].reshape(PL, D).T.astype(jnp.float32)               # (D, PL)
    d1 = diags[:, 1].reshape(PL, D).T.astype(jnp.float32) * dv[None, :]
    w_fused = (jnp.zeros((D, 2 * PLp), jnp.float32)
               .at[:, :PL].set(d0)
               .at[:, PLp:PLp + PL].set(d1)).astype(trans_dtype)
    b_fused = (jnp.zeros((1, 2 * PLp), jnp.float32)
               .at[0, :PL].set(bias_scale * bias[:, 0].reshape(PL))
               .at[0, PLp:PLp + PL].set(bias_scale * bias[:, 1].reshape(PL) * dv))

    # epsilon: semiring.from_float (relu) applied in glue, mask folded
    eps_full = jnp.pad(jnp.maximum(epsilon.astype(jnp.float32), 0.0),
                       ((0, 0), (0, 1))).reshape(PL) * dv
    eps_pad = jnp.zeros((1, PLp), jnp.float32).at[0, :PL].set(eps_full)

    # end-state selector folded into the first MLP layer (exact: selection is linear)
    end_sel = np.zeros((PLp, P), np.float32)
    end_sel[np.arange(P) * L + np.asarray(end_states), np.arange(P)] = 1.0
    w1_sel = jnp.asarray(end_sel) @ w1.astype(jnp.float32)              # (PLp, H)
    w1_p = jnp.zeros((PLp, Hp), jnp.float32).at[:, :H].set(w1_sel)
    b1_p = jnp.zeros((1, Hp), jnp.float32).at[0, :H].set(b1.astype(jnp.float32))
    w2_p = jnp.zeros((Hp, Cp), jnp.float32).at[:H, :C].set(w2.astype(jnp.float32))
    b2_p = jnp.zeros((1, Cp), jnp.float32).at[0, :C].set(b2.astype(jnp.float32))
    restart_arr = jnp.asarray(restart)

    kernel = _make_sopa_kernel(T, Bb, PLp, SB, tc, slab_dtype)
    inv = lambda g: (0, 0)                       # grid-invariant parameters

    # --- scoped VMEM sizing + cost hint ---------------------------------------
    it_t = jnp.dtype(trans_dtype).itemsize
    it_s = jnp.dtype(slab_dtype).itemsize
    need = (T * Bb * 2 * PLp * it_s                      # transition slab (scratch)
            + tc * Bb * 2 * PLp * 4                      # phase-1 transient result
            + 2 * T * Bb * D * it_t                      # emb block (double-buffered)
            + 2 * Bb * 128 * 4                           # lens block (lane-padded)
            + 2 * (D * 2 * PLp) * it_t                   # fused weights
            + 2 * (PLp * Hp + Hp * Cp) * 4               # head weights
            + 2 * (6 * PLp + Hp + Cp) * 4 * 2            # small row vectors
            + 2 * Bb * Cp * 4)                           # logits block
    try:
        vmem_cap = int(getattr(pltpu.get_tpu_info(), "vmem_capacity_bytes",
                               64 * 1024 * 1024))
    except Exception:
        vmem_cap = 64 * 1024 * 1024
    vmem_limit = int(min(max(need + (8 << 20), 32 << 20), vmem_cap - (8 << 20)))

    flops = int(2 * G * T * Bb * D * (2 * PLp)           # fused transition matmul
                + 9 * G * T * Bb * PLp                   # recurrence (VPU)
                + 2 * G * Bb * (PLp * Hp + Hp * Cp))     # MLP head
    bytes_accessed = int(G * T * Bb * D * it_t + G * Bb * 4
                         + D * 2 * PLp * it_t + (6 * PLp + Hp + Cp) * 4
                         + PLp * Hp * 4 + Hp * Cp * 4
                         + Bpad * Cp * 4)
    cost = pl.CostEstimate(flops=flops, transcendentals=0,
                           bytes_accessed=bytes_accessed)

    out = pl.pallas_call(
        kernel,
        out_shape=jax.ShapeDtypeStruct((Bpad, Cp), jnp.float32),
        grid=(G,),
        in_specs=[
            pl.BlockSpec((None, T * Bb, D), lambda g: (g, 0, 0)),   # embeddings
            pl.BlockSpec((None, Bb, 1), lambda g: (g, 0, 0)),       # doc_lens
            pl.BlockSpec((D, 2 * PLp), inv),                        # fused diags
            pl.BlockSpec((1, 2 * PLp), inv),                        # fused bias
            pl.BlockSpec((1, PLp), inv),                            # epsilon
            pl.BlockSpec((1, PLp), inv),                            # restart
            pl.BlockSpec((PLp, Hp), inv),                           # end-sel-folded w1
            pl.BlockSpec((1, Hp), inv),                             # mlp b1
            pl.BlockSpec((Hp, Cp), inv),                            # mlp w2
            pl.BlockSpec((1, Cp), inv),                             # mlp b2
        ],
        out_specs=pl.BlockSpec((Bb, Cp), lambda g: (g, 0)),
        scratch_shapes=[pltpu.VMEM((T * Bb, 2 * PLp), slab_dtype)],
        compiler_params=pltpu.CompilerParams(
            dimension_semantics=("parallel",),           # v7x: 2 TCs split batch blocks
            vmem_limit_bytes=vmem_limit),
        cost_estimate=cost,
    )(emb_g, lens_g, w_fused, b_fused, eps_pad, restart_arr,
      w1_p, b1_p, w2_p, b2_p)
    return out[:B, :C]


def sopa_forward_reference(emb, doc_lens, diags, bias, epsilon, end_states,
                           w1, b1, w2, b2, bias_scale):
    """Pure-JAX mirror of the PyTorch forward (MaxTimesSemiring)."""
    B, T, _ = emb.shape
    P, _, L, _ = diags.shape
    trans = jnp.einsum('btj,pdlj->btpdl', emb, diags) + bias_scale * bias[None, None]
    trans = jnp.maximum(trans, 0.0)
    eps_val = jnp.maximum(epsilon, 0.0)
    hiddens = jnp.zeros((B, P, L), jnp.float32).at[:, :, 0].set(1.0)
    scores = jnp.zeros((B, P), jnp.float32)
    idx = jnp.broadcast_to(jnp.asarray(end_states, jnp.int32)[None, :, None], (B, P, 1))
    for t in range(T):
        tm = trans[:, t]                                             # (B, P, 2, L)
        after_eps = jnp.maximum(
            hiddens,
            jnp.concatenate([jnp.zeros((B, P, 1)),
                             hiddens[:, :, :-1] * eps_val[None]], axis=2))
        after_main = jnp.concatenate(
            [jnp.ones((B, P, 1)), after_eps[:, :, :-1] * tm[:, :, 1, :-1]], axis=2)
        after_sl = after_eps * tm[:, :, 0, :]
        hiddens = jnp.maximum(after_main, after_sl)
        end_vals = jnp.take_along_axis(hiddens, idx, axis=2)[:, :, 0]
        active = (doc_lens > t)[:, None]
        scores = jnp.where(active, jnp.maximum(scores, end_vals), scores)
    h = jnp.maximum(scores @ w1 + b1.reshape(1, -1), 0.0)
    return h @ w2 + b2.reshape(1, -1)


if __name__ == "__main__":
    key = jax.random.PRNGKey(0)
    ks = jax.random.split(key, 10)

    # --- small synthetic configuration --------------------------------------
    pattern_specs = OrderedDict([(4, 3), (5, 3), (6, 2)])
    P = sum(pattern_specs.values())               # total_num_patterns = 8
    L = max(pattern_specs.keys())                 # max_pattern_length = 6
    end_states = np.array([plen - 1 for plen, n in pattern_specs.items()
                           for _ in range(n)], np.int32)
    D = 32          # word_dim
    H = 16          # mlp_hidden_dim
    C = 3           # num_classes
    V = 20          # vocab size
    B, T = 2, 8     # batch size, max_doc_len
    bias_scale = 0.1

    # --- deterministic synthetic parameters (MaxTimesSemiring init) ---------
    embeddings = jax.random.normal(ks[0], (V, D), jnp.float32)
    diags = jnp.maximum(2.0 + jax.random.normal(ks[1], (P, 2, L, D), jnp.float32), 0.0)
    diags = diags / jnp.linalg.norm(diags, axis=-1, keepdims=True)   # normalize()
    bias = jnp.maximum(2.0 + jax.random.normal(ks[2], (P, 2, L), jnp.float32), 0.0)
    epsilon = jax.random.normal(ks[3], (P, L - 1), jnp.float32)
    w1 = 0.3 * jax.random.normal(ks[4], (P, H), jnp.float32)
    b1 = 0.1 * jax.random.normal(ks[5], (H,), jnp.float32)
    w2 = 0.3 * jax.random.normal(ks[6], (H, C), jnp.float32)
    b2 = 0.1 * jax.random.normal(ks[7], (C,), jnp.float32)

    # --- synthetic batch: token-id docs + lengths (embedding lookup = glue) --
    docs = jax.random.randint(ks[8], (B, T), 0, V)
    doc_lens = jnp.array([T, 5], jnp.int32)
    emb = embeddings[docs]                        # (B, T, D)

    out = sopa_forward_pallas(emb, doc_lens, diags, bias, epsilon, end_states,
                              w1, b1, w2, b2, bias_scale)
    out = jax.block_until_ready(out)

    ref = sopa_forward_reference(emb, doc_lens, diags, bias, epsilon, end_states,
                                 w1, b1, w2, b2, bias_scale)
    np.testing.assert_allclose(np.asarray(out), np.asarray(ref),
                               rtol=2e-2, atol=2e-2)
    print("KERNEL_OK")
</pallas_src>

<mosaic_0001>
module attributes {stable_mosaic.version = 11 : i64} {
  func.func @kernel(%arg0: i32, %arg1: memref<1x64x32xf32, #tpu.memory_space<vmem>>, %arg2: memref<1x8x1xi32, #tpu.memory_space<vmem>>, %arg3: memref<32x256xf32, #tpu.memory_space<vmem>>, %arg4: memref<1x256xf32, #tpu.memory_space<vmem>>, %arg5: memref<1x128xf32, #tpu.memory_space<vmem>>, %arg6: memref<1x128xf32, #tpu.memory_space<vmem>>, %arg7: memref<128x128xf32, #tpu.memory_space<vmem>>, %arg8: memref<1x128xf32, #tpu.memory_space<vmem>>, %arg9: memref<128x128xf32, #tpu.memory_space<vmem>>, %arg10: memref<1x128xf32, #tpu.memory_space<vmem>>, %arg11: memref<8x128xf32, #tpu.memory_space<vmem>>, %arg12: memref<64x256xf32, #tpu.memory_space<vmem>>) attributes {dimension_semantics = [#tpu.dimension_semantics<parallel>], iteration_bounds = array<i64: 1>, scalar_prefetch = 0 : i64, scratch_operands = 1 : i64, tpu.core_type = #tpu.core_type<tc>, window_params = [{transform_indices = @transform_0, window_bounds = array<i64: 1, 64, 32>}, {transform_indices = @transform_1, window_bounds = array<i64: 1, 8, 1>}, {pipeline_mode = #tpu.pipeline_mode<synchronous>, transform_indices = @transform_2, window_bounds = array<i64: 32, 256>}, {pipeline_mode = #tpu.pipeline_mode<synchronous>, transform_indices = @transform_3, window_bounds = array<i64: 1, 256>}, {pipeline_mode = #tpu.pipeline_mode<synchronous>, transform_indices = @transform_4, window_bounds = array<i64: 1, 128>}, {pipeline_mode = #tpu.pipeline_mode<synchronous>, transform_indices = @transform_5, window_bounds = array<i64: 1, 128>}, {pipeline_mode = #tpu.pipeline_mode<synchronous>, transform_indices = @transform_6, window_bounds = array<i64: 128, 128>}, {pipeline_mode = #tpu.pipeline_mode<synchronous>, transform_indices = @transform_7, window_bounds = array<i64: 1, 128>}, {pipeline_mode = #tpu.pipeline_mode<synchronous>, transform_indices = @transform_8, window_bounds = array<i64: 128, 128>}, {pipeline_mode = #tpu.pipeline_mode<synchronous>, transform_indices = @transform_9, window_bounds = array<i64: 1, 128>}, {transform_indices = @transform_10, window_bounds = array<i64: 8, 128>}]} {
    %c0 = arith.constant 0 : index
    %c0_0 = arith.constant 0 : index
    %0 = vector.load %arg4[%c0, %c0_0] : memref<1x256xf32, #tpu.memory_space<vmem>>, vector<1x256xf32>
    %c0_i32 = arith.constant 0 : i32
    %c64_i32 = arith.constant 64 : i32
    %1 = arith.muli %c0_i32, %c64_i32 : i32
    %2 = tpu.assume_multiple %1, 64 : i32
    %c0_1 = arith.constant 0 : index
    %3 = arith.index_cast %2 : i32 to index
    %c0_2 = arith.constant 0 : index
    %4 = vector.load %arg1[%c0_1, %3, %c0_2] : memref<1x64x32xf32, #tpu.memory_space<vmem>>, vector<1x64x32xf32>
    %5 = vector.shape_cast %4 : vector<1x64x32xf32> to vector<64x32xf32>
    %c0_3 = arith.constant 0 : index
    %c0_4 = arith.constant 0 : index
    %6 = vector.load %arg3[%c0_3, %c0_4] : memref<32x256xf32, #tpu.memory_space<vmem>>, vector<32x256xf32>
    %cst = arith.constant dense<0.000000e+00> : vector<64x256xf32>
    %7 = tpu.matmul %5, %6, %cst {dimension_numbers = #tpu.dot_dimension_numbers<[1], [0], [0], [1], [0, 0, 1, 1], [], []>} : vector<64x32xf32>, vector<32x256xf32>, vector<64x256xf32> -> vector<64x256xf32>
    %8 = vector.broadcast %0 : vector<1x256xf32> to vector<64x256xf32>
    %9 = arith.addf %7, %8 : vector<64x256xf32>
    %cst_5 = arith.constant 0.000000e+00 : f32
    %10 = vector.broadcast %cst_5 : f32 to vector<64x256xf32>
    %11 = arith.maximumf %9, %10 : vector<64x256xf32>
    %12 = arith.index_cast %2 : i32 to index
    %c0_6 = arith.constant 0 : index
    %13 = vector.load %arg12[%12, %c0_6] : memref<64x256xf32, #tpu.memory_space<vmem>>, vector<64x256xf32>
    tpu.vector_store %arg12[%12, %c0_6], %11 {strides = array<i32>} : memref<64x256xf32, #tpu.memory_space<vmem>>, vector<64x256xf32>,
    %c1_i32 = arith.constant 1 : i32
    %c0_7 = arith.constant 0 : index
    %c0_8 = arith.constant 0 : index
    %14 = vector.load %arg5[%c0_7, %c0_8] : memref<1x128xf32, #tpu.memory_space<vmem>>, vector<1x128xf32>
    %15 = vector.shape_cast %14 : vector<1x128xf32> to vector<1x128xf32>
    %16 = vector.broadcast %15 : vector<1x128xf32> to vector<8x128xf32>
    %c0_9 = arith.constant 0 : index
    %c0_10 = arith.constant 0 : index
    %17 = vector.load %arg6[%c0_9, %c0_10] : memref<1x128xf32, #tpu.memory_space<vmem>>, vector<1x128xf32>
    %18 = vector.shape_cast %17 : vector<1x128xf32> to vector<1x128xf32>
    %19 = vector.broadcast %18 : vector<1x128xf32> to vector<8x128xf32>
    %c0_11 = arith.constant 0 : index
    %c0_12 = arith.constant 0 : index
    %c0_13 = arith.constant 0 : index
    %20 = vector.load %arg2[%c0_11, %c0_12, %c0_13] : memref<1x8x1xi32, #tpu.memory_space<vmem>>, vector<1x8x1xi32>
    %21 = vector.shape_cast %20 : vector<1x8x1xi32> to vector<8x1xi32>
    %22 = vector.shape_cast %21 : vector<8x1xi32> to vector<8x1xi32>
    %23 = vector.broadcast %22 : vector<8x1xi32> to vector<8x128xi32>
    %cst_14 = arith.constant 0.000000e+00 : f32
    %24 = vector.broadcast %cst_14 : f32 to vector<8x128xf32>
    %c0_i32_15 = arith.constant 0 : i32
    %c8_i32 = arith.constant 8 : i32
    %25 = arith.muli %c0_i32_15, %c8_i32 : i32
    %c0_i32_16 = arith.constant 0 : i32
    %26 = arith.addi %25, %c0_i32_16 : i32
    %27 = tpu.assume_multiple %26, 8 : i32
    %28 = arith.index_cast %27 : i32 to index
    %c0_17 = arith.constant 0 : index
    %29 = vector.load %arg12[%28, %c0_17] : memref<64x256xf32, #tpu.memory_space<vmem>>, vector<8x128xf32>
    %30 = arith.index_cast %27 : i32 to index
    %c128 = arith.constant 128 : index
    %31 = vector.load %arg12[%30, %c128] : memref<64x256xf32, #tpu.memory_space<vmem>>, vector<8x128xf32>
    %32 = arith.mulf %19, %16 : vector<8x128xf32>
    %c1_i32_18 = arith.constant 1 : i32
    %33 = tpu.dynamic_rotate %32 by %c1_i32_18 dim 1 : vector<8x128xf32>, i32 -> vector<8x128xf32>
    %34 = arith.maximumf %19, %33 : vector<8x128xf32>
    %35 = arith.mulf %34, %31 : vector<8x128xf32>
    %c1_i32_19 = arith.constant 1 : i32
    %36 = tpu.dynamic_rotate %35 by %c1_i32_19 dim 1 : vector<8x128xf32>, i32 -> vector<8x128xf32>
    %37 = arith.addf %36, %19 : vector<8x128xf32>
    %38 = arith.mulf %34, %29 : vector<8x128xf32>
    %39 = arith.maximumf %37, %38 : vector<8x128xf32>
    %40 = vector.broadcast %c0_i32_15 : i32 to vector<8x128xi32>
    %41 = arith.cmpi sgt, %23, %40 : vector<8x128xi32>
    %cst_20 = arith.constant 0.000000e+00 : f32
    %42 = vector.broadcast %cst_20 : f32 to vector<8x128xf32>
    %43 = arith.select %41, %39, %42 : vector<8x128xi1>, vector<8x128xf32>
    %44 = arith.maximumf %24, %43 : vector<8x128xf32>
    %c1_i32_21 = arith.constant 1 : i32
    %c8_i32_22 = arith.constant 8 : i32
    %45 = arith.muli %c1_i32_21, %c8_i32_22 : i32
    %c0_i32_23 = arith.constant 0 : i32
    %46 = arith.addi %45, %c0_i32_23 : i32
    %47 = tpu.assume_multiple %46, 8 : i32
    %48 = arith.index_cast %47 : i32 to index
    %c0_24 = arith.constant 0 : index
    %49 = vector.load %arg12[%48, %c0_24] : memref<64x256xf32, #tpu.memory_space<vmem>>, vector<8x128xf32>
    %50 = arith.index_cast %47 : i32 to index
    %c128_25 = arith.constant 128 : index
    %51 = vector.load %arg12[%50, %c128_25] : memref<64x256xf32, #tpu.memory_space<vmem>>, vector<8x128xf32>
    %52 = arith.mulf %39, %16 : vector<8x128xf32>
    %c1_i32_26 = arith.constant 1 : i32
    %53 = tpu.dynamic_rotate %52 by %c1_i32_26 dim 1 : vector<8x128xf32>, i32 -> vector<8x128xf32>
    %54 = arith.maximumf %39, %53 : vector<8x128xf32>
    %55 = arith.mulf %54, %51 : vector<8x128xf32>
    %c1_i32_27 = arith.constant 1 : i32
    %56 = tpu.dynamic_rotate %55 by %c1_i32_27 dim 1 : vector<8x128xf32>, i32 -> vector<8x128xf32>
    %57 = arith.addf %56, %19 : vector<8x128xf32>
    %58 = arith.mulf %54, %49 : vector<8x128xf32>
    %59 = arith.maximumf %57, %58 : vector<8x128xf32>
    %60 = vector.broadcast %c1_i32_21 : i32 to vector<8x128xi32>
    %61 = arith.cmpi sgt, %23, %60 : vector<8x128xi32>
    %cst_28 = arith.constant 0.000000e+00 : f32
    %62 = vector.broadcast %cst_28 : f32 to vector<8x128xf32>
    %63 = arith.select %61, %59, %62 : vector<8x128xi1>, vector<8x128xf32>
    %64 = arith.maximumf %44, %63 : vector<8x128xf32>
    %c2_i32 = arith.constant 2 : i32
    %c8_i32_29 = arith.constant 8 : i32
    %65 = arith.muli %c2_i32, %c8_i32_29 : i32
    %c0_i32_30 = arith.constant 0 : i32
    %66 = arith.addi %65, %c0_i32_30 : i32
    %67 = tpu.assume_multiple %66, 8 : i32
    %68 = arith.index_cast %67 : i32 to index
    %c0_31 = arith.constant 0 : index
    %69 = vector.load %arg12[%68, %c0_31] : memref<64x256xf32, #tpu.memory_space<vmem>>, vector<8x128xf32>
    %70 = arith.index_cast %67 : i32 to index
    %c128_32 = arith.constant 128 : index
    %71 = vector.load %arg12[%70, %c128_32] : memref<64x256xf32, #tpu.memory_space<vmem>>, vector<8x128xf32>
    %72 = arith.mulf %59, %16 : vector<8x128xf32>
    %c1_i32_33 = arith.constant 1 : i32
    %73 = tpu.dynamic_rotate %72 by %c1_i32_33 dim 1 : vector<8x128xf32>, i32 -> vector<8x128xf32>
    %74 = arith.maximumf %59, %73 : vector<8x128xf32>
    %75 = arith.mulf %74, %71 : vector<8x128xf32>
    %c1_i32_34 = arith.constant 1 : i32
    %76 = tpu.dynamic_rotate %75 by %c1_i32_34 dim 1 : vector<8x128xf32>, i32 -> vector<8x128xf32>
    %77 = arith.addf %76, %19 : vector<8x128xf32>
    %78 = arith.mulf %74, %69 : vector<8x128xf32>
    %79 = arith.maximumf %77, %78 : vector<8x128xf32>
    %80 = vector.broadcast %c2_i32 : i32 to vector<8x128xi32>
    %81 = arith.cmpi sgt, %23, %80 : vector<8x128xi32>
    %cst_35 = arith.constant 0.000000e+00 : f32
    %82 = vector.broadcast %cst_35 : f32 to vector<8x128xf32>
    %83 = arith.select %81, %79, %82 : vector<8x128xi1>, vector<8x128xf32>
    %84 = arith.maximumf %64, %83 : vector<8x128xf32>
    %c3_i32 = arith.constant 3 : i32
    %c8_i32_36 = arith.constant 8 : i32
    %85 = arith.muli %c3_i32, %c8_i32_36 : i32
    %c0_i32_37 = arith.constant 0 : i32
    %86 = arith.addi %85, %c0_i32_37 : i32
    %87 = tpu.assume_multiple %86, 8 : i32
    %88 = arith.index_cast %87 : i32 to index
    %c0_38 = arith.constant 0 : index
    %89 = vector.load %arg12[%88, %c0_38] : memref<64x256xf32, #tpu.memory_space<vmem>>, vector<8x128xf32>
    %90 = arith.index_cast %87 : i32 to index
    %c128_39 = arith.constant 128 : index
    %91 = vector.load %arg12[%90, %c128_39] : memref<64x256xf32, #tpu.memory_space<vmem>>, vector<8x128xf32>
    %92 = arith.mulf %79, %16 : vector<8x128xf32>
    %c1_i32_40 = arith.constant 1 : i32
    %93 = tpu.dynamic_rotate %92 by %c1_i32_40 dim 1 : vector<8x128xf32>, i32 -> vector<8x128xf32>
    %94 = arith.maximumf %79, %93 : vector<8x128xf32>
    %95 = arith.mulf %94, %91 : vector<8x128xf32>
    %c1_i32_41 = arith.constant 1 : i32
    %96 = tpu.dynamic_rotate %95 by %c1_i32_41 dim 1 : vector<8x128xf32>, i32 -> vector<8x128xf32>
    %97 = arith.addf %96, %19 : vector<8x128xf32>
    %98 = arith.mulf %94, %89 : vector<8x128xf32>
    %99 = arith.maximumf %97, %98 : vector<8x128xf32>
    %100 = vector.broadcast %c3_i32 : i32 to vector<8x128xi32>
    %101 = arith.cmpi sgt, %23, %100 : vector<8x128xi32>
    %cst_42 = arith.constant 0.000000e+00 : f32
    %102 = vector.broadcast %cst_42 : f32 to vector<8x128xf32>
    %103 = arith.select %101, %99, %102 : vector<8x128xi1>, vector<8x128xf32>
    %104 = arith.maximumf %84, %103 : vector<8x128xf32>
    %c4_i32 = arith.constant 4 : i32
    %c8_i32_43 = arith.constant 8 : i32
    %105 = arith.muli %c4_i32, %c8_i32_43 : i32
    %c0_i32_44 = arith.constant 0 : i32
    %106 = arith.addi %105, %c0_i32_44 : i32
    %107 = tpu.assume_multiple %106, 8 : i32
    %108 = arith.index_cast %107 : i32 to index
    %c0_45 = arith.constant 0 : index
    %109 = vector.load %arg12[%108, %c0_45] : memref<64x256xf32, #tpu.memory_space<vmem>>, vector<8x128xf32>
    %110 = arith.index_cast %107 : i32 to index
    %c128_46 = arith.constant 128 : index
    %111 = vector.load %arg12[%110, %c128_46] : memref<64x256xf32, #tpu.memory_space<vmem>>, vector<8x128xf32>
    %112 = arith.mulf %99, %16 : vector<8x128xf32>
    %c1_i32_47 = arith.constant 1 : i32
    %113 = tpu.dynamic_rotate %112 by %c1_i32_47 dim 1 : vector<8x128xf32>, i32 -> vector<8x128xf32>
    %114 = arith.maximumf %99, %113 : vector<8x128xf32>
    %115 = arith.mulf %114, %111 : vector<8x128xf32>
    %c1_i32_48 = arith.constant 1 : i32
    %116 = tpu.dynamic_rotate %115 by %c1_i32_48 dim 1 : vector<8x128xf32>, i32 -> vector<8x128xf32>
    %117 = arith.addf %116, %19 : vector<8x128xf32>
    %118 = arith.mulf %114, %109 : vector<8x128xf32>
    %119 = arith.maximumf %117, %118 : vector<8x128xf32>
    %120 = vector.broadcast %c4_i32 : i32 to vector<8x128xi32>
    %121 = arith.cmpi sgt, %23, %120 : vector<8x128xi32>
    %cst_49 = arith.constant 0.000000e+00 : f32
    %122 = vector.broadcast %cst_49 : f32 to vector<8x128xf32>
    %123 = arith.select %121, %119, %122 : vector<8x128xi1>, vector<8x128xf32>
    %124 = arith.maximumf %104, %123 : vector<8x128xf32>
    %c5_i32 = arith.constant 5 : i32
    %c8_i32_50 = arith.constant 8 : i32
    %125 = arith.muli %c5_i32, %c8_i32_50 : i32
    %c0_i32_51 = arith.constant 0 : i32
    %126 = arith.addi %125, %c0_i32_51 : i32
    %127 = tpu.assume_multiple %126, 8 : i32
    %128 = arith.index_cast %127 : i32 to index
    %c0_52 = arith.constant 0 : index
    %129 = vector.load %arg12[%128, %c0_52] : memref<64x256xf32, #tpu.memory_space<vmem>>, vector<8x128xf32>
    %130 = arith.index_cast %127 : i32 to index
    %c128_53 = arith.constant 128 : index
    %131 = vector.load %arg12[%130, %c128_53] : memref<64x256xf32, #tpu.memory_space<vmem>>, vector<8x128xf32>
    %132 = arith.mulf %119, %16 : vector<8x128xf32>
    %c1_i32_54 = arith.constant 1 : i32
    %133 = tpu.dynamic_rotate %132 by %c1_i32_54 dim 1 : vector<8x128xf32>, i32 -> vector<8x128xf32>
    %134 = arith.maximumf %119, %133 : vector<8x128xf32>
    %135 = arith.mulf %134, %131 : vector<8x128xf32>
    %c1_i32_55 = arith.constant 1 : i32
    %136 = tpu.dynamic_rotate %135 by %c1_i32_55 dim 1 : vector<8x128xf32>, i32 -> vector<8x128xf32>
    %137 = arith.addf %136, %19 : vector<8x128xf32>
    %138 = arith.mulf %134, %129 : vector<8x128xf32>
    %139 = arith.maximumf %137, %138 : vector<8x128xf32>
    %140 = vector.broadcast %c5_i32 : i32 to vector<8x128xi32>
    %141 = arith.cmpi sgt, %23, %140 : vector<8x128xi32>
    %cst_56 = arith.constant 0.000000e+00 : f32
    %142 = vector.broadcast %cst_56 : f32 to vector<8x128xf32>
    %143 = arith.select %141, %139, %142 : vector<8x128xi1>, vector<8x128xf32>
    %144 = arith.maximumf %124, %143 : vector<8x128xf32>
    %c6_i32 = arith.constant 6 : i32
    %c8_i32_57 = arith.constant 8 : i32
    %145 = arith.muli %c6_i32, %c8_i32_57 : i32
    %c0_i32_58 = arith.constant 0 : i32
    %146 = arith.addi %145, %c0_i32_58 : i32
    %147 = tpu.assume_multiple %146, 8 : i32
    %148 = arith.index_cast %147 : i32 to index
    %c0_59 = arith.constant 0 : index
    %149 = vector.load %arg12[%148, %c0_59] : memref<64x256xf32, #tpu.memory_space<vmem>>, vector<8x128xf32>
    %150 = arith.index_cast %147 : i32 to index
    %c128_60 = arith.constant 128 : index
    %151 = vector.load %arg12[%150, %c128_60] : memref<64x256xf32, #tpu.memory_space<vmem>>, vector<8x128xf32>
    %152 = arith.mulf %139, %16 : vector<8x128xf32>
    %c1_i32_61 = arith.constant 1 : i32
    %153 = tpu.dynamic_rotate %152 by %c1_i32_61 dim 1 : vector<8x128xf32>, i32 -> vector<8x128xf32>
    %154 = arith.maximumf %139, %153 : vector<8x128xf32>
    %155 = arith.mulf %154, %151 : vector<8x128xf32>
    %c1_i32_62 = arith.constant 1 : i32
    %156 = tpu.dynamic_rotate %155 by %c1_i32_62 dim 1 : vector<8x128xf32>, i32 -> vector<8x128xf32>
    %157 = arith.addf %156, %19 : vector<8x128xf32>
    %158 = arith.mulf %154, %149 : vector<8x128xf32>
    %159 = arith.maximumf %157, %158 : vector<8x128xf32>
    %160 = vector.broadcast %c6_i32 : i32 to vector<8x128xi32>
    %161 = arith.cmpi sgt, %23, %160 : vector<8x128xi32>
    %cst_63 = arith.constant 0.000000e+00 : f32
    %162 = vector.broadcast %cst_63 : f32 to vector<8x128xf32>
    %163 = arith.select %161, %159, %162 : vector<8x128xi1>, vector<8x128xf32>
    %164 = arith.maximumf %144, %163 : vector<8x128xf32>
    %c7_i32 = arith.constant 7 : i32
    %c8_i32_64 = arith.constant 8 : i32
    %165 = arith.muli %c7_i32, %c8_i32_64 : i32
    %c0_i32_65 = arith.constant 0 : i32
    %166 = arith.addi %165, %c0_i32_65 : i32
    %167 = tpu.assume_multiple %166, 8 : i32
    %168 = arith.index_cast %167 : i32 to index
    %c0_66 = arith.constant 0 : index
    %169 = vector.load %arg12[%168, %c0_66] : memref<64x256xf32, #tpu.memory_space<vmem>>, vector<8x128xf32>
    %170 = arith.index_cast %167 : i32 to index
    %c128_67 = arith.constant 128 : index
    %171 = vector.load %arg12[%170, %c128_67] : memref<64x256xf32, #tpu.memory_space<vmem>>, vector<8x128xf32>
    %172 = arith.mulf %159, %16 : vector<8x128xf32>
    %c1_i32_68 = arith.constant 1 : i32
    %173 = tpu.dynamic_rotate %172 by %c1_i32_68 dim 1 : vector<8x128xf32>, i32 -> vector<8x128xf32>
    %174 = arith.maximumf %159, %173 : vector<8x128xf32>
    %175 = arith.mulf %174, %171 : vector<8x128xf32>
    %c1_i32_69 = arith.constant 1 : i32
    %176 = tpu.dynamic_rotate %175 by %c1_i32_69 dim 1 : vector<8x128xf32>, i32 -> vector<8x128xf32>
    %177 = arith.addf %176, %19 : vector<8x128xf32>
    %178 = arith.mulf %174, %169 : vector<8x128xf32>
    %179 = arith.maximumf %177, %178 : vector<8x128xf32>
    %180 = vector.broadcast %c7_i32 : i32 to vector<8x128xi32>
    %181 = arith.cmpi sgt, %23, %180 : vector<8x128xi32>
    %cst_70 = arith.constant 0.000000e+00 : f32
    %182 = vector.broadcast %cst_70 : f32 to vector<8x128xf32>
    %183 = arith.select %181, %179, %182 : vector<8x128xi1>, vector<8x128xf32>
    %184 = arith.maximumf %164, %183 : vector<8x128xf32>
    %c8_i32_71 = arith.constant 8 : i32
    %c0_72 = arith.constant 0 : index
    %c0_73 = arith.constant 0 : index
    %185 = vector.load %arg7[%c0_72, %c0_73] : memref<128x128xf32, #tpu.memory_space<vmem>>, vector<128x128xf32>
    %cst_74 = arith.constant dense<0.000000e+00> : vector<8x128xf32>
    %186 = tpu.matmul %184, %185, %cst_74 {dimension_numbers = #tpu.dot_dimension_numbers<[1], [0], [0], [1], [0, 0, 1, 1], [], []>} : vector<8x128xf32>, vector<128x128xf32>, vector<8x128xf32> -> vector<8x128xf32>
    %c0_75 = arith.constant 0 : index
    %c0_76 = arith.constant 0 : index
    %187 = vector.load %arg8[%c0_75, %c0_76] : memref<1x128xf32, #tpu.memory_space<vmem>>, vector<1x128xf32>
    %188 = vector.broadcast %187 : vector<1x128xf32> to vector<8x128xf32>
    %189 = arith.addf %186, %188 : vector<8x128xf32>
    %cst_77 = arith.constant 0.000000e+00 : f32
    %190 = vector.broadcast %cst_77 : f32 to vector<8x128xf32>
    %191 = arith.maximumf %189, %190 : vector<8x128xf32>
    %c0_78 = arith.constant 0 : index
    %c0_79 = arith.constant 0 : index
    %192 = vector.load %arg9[%c0_78, %c0_79] : memref<128x128xf32, #tpu.memory_space<vmem>>, vector<128x128xf32>
    %cst_80 = arith.constant dense<0.000000e+00> : vector<8x128xf32>
    %193 = tpu.matmul %191, %192, %cst_80 {dimension_numbers = #tpu.dot_dimension_numbers<[1], [0], [0], [1], [0, 0, 1, 1], [], []>} : vector<8x128xf32>, vector<128x128xf32>, vector<8x128xf32> -> vector<8x128xf32>
    %c0_81 = arith.constant 0 : index
    %c0_82 = arith.constant 0 : index
    %194 = vector.load %arg10[%c0_81, %c0_82] : memref<1x128xf32, #tpu.memory_space<vmem>>, vector<1x128xf32>
    %195 = vector.broadcast %194 : vector<1x128xf32> to vector<8x128xf32>
    %196 = arith.addf %193, %195 : vector<8x128xf32>
    %c0_83 = arith.constant 0 : index
    %c0_84 = arith.constant 0 : index
    %197 = vector.load %arg11[%c0_83, %c0_84] : memref<8x128xf32, #tpu.memory_space<vmem>>, vector<8x128xf32>
    tpu.vector_store %arg11[%c0_83, %c0_84], %196 {strides = array<i32>} : memref<8x128xf32, #tpu.memory_space<vmem>>, vector<8x128xf32>,
    return
  }
  func.func @transform_0(%arg0: i32) -> (i32, i32, i32) {
    %c0_i32 = arith.constant 0 : i32
    %c0_i32_0 = arith.constant 0 : i32
    %c0_i32_1 = arith.constant 0 : i32
    return %arg0, %c0_i32, %c0_i32_0 : i32, i32, i32
  }
  func.func @transform_1(%arg0: i32) -> (i32, i32, i32) {
    %c0_i32 = arith.constant 0 : i32
    %c0_i32_0 = arith.constant 0 : i32
    %c0_i32_1 = arith.constant 0 : i32
    return %arg0, %c0_i32, %c0_i32_0 : i32, i32, i32
  }
  func.func @transform_2(%arg0: i32) -> (i32, i32) {
    %c0_i32 = arith.constant 0 : i32
    %c0_i32_0 = arith.constant 0 : i32
    %c0_i32_1 = arith.constant 0 : i32
    return %c0_i32, %c0_i32_0 : i32, i32
  }
  func.func @transform_3(%arg0: i32) -> (i32, i32) {
    %c0_i32 = arith.constant 0 : i32
    %c0_i32_0 = arith.constant 0 : i32
    %c0_i32_1 = arith.constant 0 : i32
    return %c0_i32, %c0_i32_0 : i32, i32
  }
  func.func @transform_4(%arg0: i32) -> (i32, i32) {
    %c0_i32 = arith.constant 0 : i32
    %c0_i32_0 = arith.constant 0 : i32
    %c0_i32_1 = arith.constant 0 : i32
    return %c0_i32, %c0_i32_0 : i32, i32
  }
  func.func @transform_5(%arg0: i32) -> (i32, i32) {
    %c0_i32 = arith.constant 0 : i32
    %c0_i32_0 = arith.constant 0 : i32
    %c0_i32_1 = arith.constant 0 : i32
    return %c0_i32, %c0_i32_0 : i32, i32
  }
  func.func @transform_6(%arg0: i32) -> (i32, i32) {
    %c0_i32 = arith.constant 0 : i32
    %c0_i32_0 = arith.constant 0 : i32
    %c0_i32_1 = arith.constant 0 : i32
    return %c0_i32, %c0_i32_0 : i32, i32
  }
  func.func @transform_7(%arg0: i32) -> (i32, i32) {
    %c0_i32 = arith.constant 0 : i32
    %c0_i32_0 = arith.constant 0 : i32
    %c0_i32_1 = arith.constant 0 : i32
    return %c0_i32, %c0_i32_0 : i32, i32
  }
  func.func @transform_8(%arg0: i32) -> (i32, i32) {
    %c0_i32 = arith.constant 0 : i32
    %c0_i32_0 = arith.constant 0 : i32
    %c0_i32_1 = arith.constant 0 : i32
    return %c0_i32, %c0_i32_0 : i32, i32
  }
  func.func @transform_9(%arg0: i32) -> (i32, i32) {
    %c0_i32 = arith.constant 0 : i32
    %c0_i32_0 = arith.constant 0 : i32
    %c0_i32_1 = arith.constant 0 : i32
    return %c0_i32, %c0_i32_0 : i32, i32
  }
  func.func @transform_10(%arg0: i32) -> (i32, i32) {
    %c0_i32 = arith.constant 0 : i32
    %c0_i32_0 = arith.constant 0 : i32
    return %arg0, %c0_i32 : i32, i32
  }
}

</mosaic_0001>

<llo_original>
// kernel: tpu_custom_call.1
$region0: #{tpu_custom_call.1}
  #allocation0 [shape = 'u32[]', space=smem, size = 0x4, offset = 0x4, fixed_abs, tag = 'smem constant byte address 0x4 - core index']
  #allocation1 [shape = 'u32[144,128]{1,0:T(1,128)}', space=vmem, size = 0x12000, scoped, tag = 'internal scratch']
  #allocation2 [shape = 'f32[64,256]{1,0:T(8,128)}', space=vmem, size = 0x10000, scoped, tag = 'scratch operand']
  %s0 = inlined_call_operand.vmem [shape: f32[1,64,32], index: 0, kind: input, shape index: {}]
  %s1 = inlined_call_operand.vmem [shape: s32[1,8,1], index: 1, kind: input, shape index: {}]
  %s2 = inlined_call_operand.hbm [shape: f32[32,256], index: 2, kind: input, shape index: {}]
  %s3 = inlined_call_operand.vmem [shape: f32[1,256], index: 3, kind: input, shape index: {}]
  %s4 = inlined_call_operand.vmem [shape: f32[1,128], index: 4, kind: input, shape index: {}]
  %s5 = inlined_call_operand.vmem [shape: f32[1,128], index: 5, kind: input, shape index: {}]
  %s6 = inlined_call_operand.hbm [shape: f32[128,128], index: 6, kind: input, shape index: {}]
  %s7 = inlined_call_operand.vmem [shape: f32[1,128], index: 7, kind: input, shape index: {}]
  %s8 = inlined_call_operand.vmem [shape: f32[128,128], index: 8, kind: input, shape index: {}]
  %s9 = inlined_call_operand.vmem [shape: f32[1,128], index: 9, kind: input, shape index: {}]
  %s10 = inlined_call_operand.hbm [shape: f32[8,128], index: 10, kind: output, shape index: {}]
  %s11 = sld [smem:[#allocation0]]
  $region58: #{tpu_custom_call.1} parent=0
    _
  %s13 = ssub.s32 1, %s11
  %s14 = scalar_select 0, %s13, %s11
  $region1: #{tpu_custom_call.1} parent=0
    #allocation3 [shape = 'u8[32768]{0}', space=vmem, size = 0x8000, scoped, tag = 'input window, operand 2, single buffered']
    #allocation4 [shape = 's32[1]{0}', space=sflag, size = 0x4, scoped, tag = 'scoped memory for tpu_custom_call.1']
    #allocation5 [shape = 's32[1]{0}', space=sflag, size = 0x4, scoped, tag = 'scoped memory for tpu_custom_call.1']
    #allocation6 [shape = 'u8[65536]{0}', space=vmem, size = 0x10000, scoped, tag = 'input window, operand 6, single buffered']
    #allocation7 [shape = 's32[1]{0}', space=sflag, size = 0x4, scoped, tag = 'scoped memory for tpu_custom_call.1']
    #allocation8 [shape = 'u8[4096]{0}', space=vmem, size = 0x1000, scoped, tag = 'output window, operand 0, single buffered']
    %15 = vsyncpa [#allocation4], 0
    %16 = vsyncpa [#allocation7], 0
    %17 = vsyncpa [#allocation5], 0
    // Predicated region
    $region2: #{tpu_custom_call.1} parent=1 // pred_check
      _
    $region3: #{tpu_custom_call.1} parent=1 // pred_check_branch
      %19 = sbr.rel (0) target = $region5
    $region4: #{tpu_custom_call.1} parent=1 // pred_region
      _
    $region5: #{tpu_custom_call.1} parent=1 // pred_fallthru
      _
    // Predicated region
    $region6: #{tpu_custom_call.1} parent=1 // pred_check
      _
    $region7: #{tpu_custom_call.1} parent=1 // pred_check_branch
      %21 = sbr.rel (0) target = $region9
    $region8: #{tpu_custom_call.1} parent=1 // pred_region
      _
    $region9: #{tpu_custom_call.1} parent=1 // pred_fallthru
      _
    // Predicated region
    $region10: #{tpu_custom_call.1} parent=1 // pred_check
      _
    $region11: #{tpu_custom_call.1} parent=1 // pred_check_branch
      %23 = sbr.rel (0) target = $region13
    $region12: #{tpu_custom_call.1} parent=1 // pred_region
      %s25 = ssub.s32 1024, 1024
      %26 = vsyncadd [#allocation4], %s25
      %s27 = sshll.u32 [#allocation3], 4
      %s28 = int_to_ptr.vmem [resolvable:$true] %s27
      %33 = dma.hbm_to_vmem [thread:$0]  %s2, 1024, %s28, [#allocation4], 256, 256, 16
    $region13: #{tpu_custom_call.1} parent=1 // pred_fallthru
      _
    // Predicated region
    $region14: #{tpu_custom_call.1} parent=1 // pred_check
      _
    $region15: #{tpu_custom_call.1} parent=1 // pred_check_branch
      %35 = sbr.rel (0) target = $region17
    $region16: #{tpu_custom_call.1} parent=1 // pred_region
      _
    $region17: #{tpu_custom_call.1} parent=1 // pred_fallthru
      _
    // Predicated region
    $region18: #{tpu_custom_call.1} parent=1 // pred_check
      _
    $region19: #{tpu_custom_call.1} parent=1 // pred_check_branch
      %37 = sbr.rel (0) target = $region21
    $region20: #{tpu_custom_call.1} parent=1 // pred_region
      _
    $region21: #{tpu_custom_call.1} parent=1 // pred_fallthru
      _
    // Predicated region
    $region22: #{tpu_custom_call.1} parent=1 // pred_check
      _
    $region23: #{tpu_custom_call.1} parent=1 // pred_check_branch
      %39 = sbr.rel (0) target = $region25
    $region24: #{tpu_custom_call.1} parent=1 // pred_region
      _
    $region25: #{tpu_custom_call.1} parent=1 // pred_fallthru
      _
    // Predicated region
    $region26: #{tpu_custom_call.1} parent=1 // pred_check
      _
    $region27: #{tpu_custom_call.1} parent=1 // pred_check_branch
      %41 = sbr.rel (0) target = $region29
    $region28: #{tpu_custom_call.1} parent=1 // pred_region
      %s43 = ssub.s32 2048, 2048
      %44 = vsyncadd [#allocation7], %s43
      %s45 = sshll.u32 [#allocation6], 4
      %s46 = int_to_ptr.vmem [resolvable:$true] %s45
      %51 = dma.hbm_to_vmem [thread:$0]  %s6, 2048, %s46, [#allocation7], 128, 128, 8
    $region29: #{tpu_custom_call.1} parent=1 // pred_fallthru
      _
    // Predicated region
    $region30: #{tpu_custom_call.1} parent=1 // pred_check
      _
    $region31: #{tpu_custom_call.1} parent=1 // pred_check_branch
      %53 = sbr.rel (0) target = $region33
    $region32: #{tpu_custom_call.1} parent=1 // pred_region
      _
    $region33: #{tpu_custom_call.1} parent=1 // pred_fallthru
      _
    // Predicated region
    $region34: #{tpu_custom_call.1} parent=1 // pred_check
      _
    $region35: #{tpu_custom_call.1} parent=1 // pred_check_branch
      %55 = sbr.rel (0) target = $region37
    $region36: #{tpu_custom_call.1} parent=1 // pred_region
      _
    $region37: #{tpu_custom_call.1} parent=1 // pred_fallthru
      _
    // Predicated region
    $region38: #{tpu_custom_call.1} parent=1 // pred_check
      _
    $region39: #{tpu_custom_call.1} parent=1 // pred_check_branch
      %57 = sbr.rel (0) target = $region41
    $region40: #{tpu_custom_call.1} parent=1 // pred_region
      _
    $region41: #{tpu_custom_call.1} parent=1 // pred_fallthru
      _
    // Predicated region
    $region42: #{tpu_custom_call.1} parent=1 // pred_check
      _
    $region43: #{tpu_custom_call.1} parent=1 // pred_check_branch
      %59 = sbr.rel (0) target = $region45
    $region44: #{tpu_custom_call.1} parent=1 // pred_region
      %60 = dma.done [#allocation4], 1024
    $region45: #{tpu_custom_call.1} parent=1 // pred_fallthru
      _
    // Predicated region
    $region46: #{tpu_custom_call.1} parent=1 // pred_check
      _
    $region47: #{tpu_custom_call.1} parent=1 // pred_check_branch
      %62 = sbr.rel (0) target = $region49
    $region48: #{tpu_custom_call.1} parent=1 // pred_region
      %63 = dma.done [#allocation7], 2048
    $region49: #{tpu_custom_call.1} parent=1 // pred_fallthru
      _
    %v64 = vld [vmem:[%s3] sm:$0x3]
    %v65 = vld [vmem:[%s0] sm:$0xff]
    %v66 = vld [vmem:[%s0 + $0x8] sm:$0xff]
    %v67 = vld [vmem:[%s0 + $0x10] sm:$0xff]
    %v68 = vld [vmem:[%s0 + $0x18] sm:$0xff]
    %v69 = vld [vmem:[%s0 + $0x20] sm:$0xff]
    %v70 = vld [vmem:[%s0 + $0x28] sm:$0xff]
    %v71 = vld [vmem:[%s0 + $0x30] sm:$0xff]
    %v72 = vld [vmem:[%s0 + $0x38] sm:$0xff]
    %v73 = vld [vmem:[#allocation3] sm:$0xff]
    %v74 = vld [vmem:[#allocation3 + $0x8] sm:$0xff]
    %v75 = vld [vmem:[#allocation3 + $0x10] sm:$0xff]
    %v76 = vld [vmem:[#allocation3 + $0x18] sm:$0xff]
    %v77 = vld [vmem:[#allocation3 + $0x20] sm:$0xff]
    %v78 = vld [vmem:[#allocation3 + $0x28] sm:$0xff]
    %v79 = vld [vmem:[#allocation3 + $0x30] sm:$0xff]
    %v80 = vld [vmem:[#allocation3 + $0x38] sm:$0xff]
    %v82 = vlaneseq
    %v83 = vshrl.u32 %v82, 7
    %v84 = vsub.s32 0, %v83
    %v85 = vrot.slane %v64, %v84
    %v86 = vlaneseq
    %v87 = vshrl.u32 %v86, 7
    %v88 = vsub.s32 1, %v87
    %v89 = vrot.slane %v64, %v88
    %vm92 = vcmask 261120
    %v94 = vsel %vm92, %v65, 0
    %v97 = vsel %vm92, %v66, 0
    %v100 = vsel %vm92, %v67, 0
    %v103 = vsel %vm92, %v68, 0
    %v106 = vsel %vm92, %v69, 0
    %v109 = vsel %vm92, %v70, 0
    %v112 = vsel %vm92, %v71, 0
    %v115 = vsel %vm92, %v72, 0
    %117 = vmatprep.subr.mxu0 %v74
    %118 = vmatpush1.msra.mxu0 %v73
    %119 = vmatprep.subr.mxu0 %v76
    %120 = vmatpush1.msra.mxu0 %v75
    %121 = vmatprep.subr.mxu0 %v78
    %122 = vmatpush1.msra.mxu0 %v77
    %123 = vmatprep.subr.mxu0 %v80
    %124 = vmatpush1.msra.mxu0 %v79
    %125 = vmatprep.subr.mxu0 0.0
    %126 = vmatpush1.msra.mxu0 0.0
    %127 = vmatprep.subr.mxu0 0.0
    %128 = vmatpush1.msra.mxu0 0.0
    %129 = vmatprep.subr.mxu0 0.0
    %130 = vmatpush1.msra.mxu0 0.0
    %131 = vmatprep.subr.mxu0 0.0
    %132 = vmatpush1.msra.mxu0 0.0
    %133 = vmatprep.subr.mxu0 0.0
    %134 = vmatpush1.msra.mxu0 0.0
    %135 = vmatprep.subr.mxu0 0.0
    %136 = vmatpush1.msra.mxu0 0.0
    %137 = vmatprep.subr.mxu0 0.0
    %138 = vmatpush1.msra.mxu0 0.0
    %139 = vmatprep.subr.mxu0 0.0
    %140 = vmatpush1.msra.mxu0 0.0
    %141 = vmatprep.subr.mxu0 0.0
    %142 = vmatpush1.msra.mxu0 0.0
    %143 = vmatprep.subr.mxu0 0.0
    %144 = vmatpush1.msra.mxu0 0.0
    %145 = vmatprep.subr.mxu0 0.0
    %146 = vmatpush1.msra.mxu0 0.0
    %147 = vmatprep.subr.mxu0 0.0
    %148 = vmatpush1.msra.mxu0 0.0
    %149 = vmatprep.subr.mxu0 0.0
    %150 = vmatpush1.msra.mxu0 0.0
    %151 = vmatprep.subr.mxu0 0.0
    %152 = vmatpush1.msra.mxu0 0.0
    %153 = vmatprep.subr.mxu0 0.0
    %154 = vmatpush1.msra.mxu0 0.0
    %155 = vmatprep.subr.mxu0 0.0
    %156 = vmatpush1.msra.mxu0 0.0
    %157 = vmatprep.subr.mxu0 0.0
    %158 = vmatpush1.msra.mxu0 0.0
    %159 = vmatprep.subr.mxu0 0.0
    %160 = vmatpush1.msra.mxu0 0.0
    %161 = vmatprep.subr.mxu0 0.0
    %162 = vmatpush1.msra.mxu0 0.0
    %163 = vmatprep.subr.mxu0 0.0
    %164 = vmatpush1.msra.mxu0 0.0
    %165 = vmatprep.subr.mxu0 0.0
    %166 = vmatpush1.msra.mxu0 0.0
    %167 = vmatprep.subr.mxu0 0.0
    %168 = vmatpush1.msra.mxu0 0.0
    %169 = vmatprep.subr.mxu0 0.0
    %170 = vmatpush1.msra.mxu0 0.0
    %171 = vmatprep.subr.mxu0 0.0
    %172 = vmatpush1.msra.mxu0 0.0
    %173 = vmatprep.subr.mxu0 0.0
    %174 = vmatpush1.msra.mxu0 0.0
    %175 = vmatprep.subr.mxu0 0.0
    %176 = vmatpush1.msra.mxu0 0.0
    %177 = vmatprep.subr.mxu0 0.0
    %178 = vmatpush1.msra.mxu0 0.0
    %179 = vmatprep.subr.mxu0 0.0
    %180 = vmatpush1.msra.mxu0 0.0
    %181 = vmatprep.mubr.f32.mxu0 0.0
    %182 = vmatmul.mubr.f32.gmra.mrb[0].mxu0 %v94
    %v183 = vpop.f32.mrb[0].mxu0
    %v184 = vadd.f32 %v85, %v183
    %v185 = vpop.f32.mrb[0].mxu0
    %v186 = vadd.f32 %v89, %v185
    %187 = vmatprep.mubr.f32.mxu0 0.0
    %188 = vmatmul.mubr.f32.gmra.mrb[0].mxu0 %v97
    %v189 = vpop.f32.mrb[0].mxu0
    %v190 = vadd.f32 %v85, %v189
    %v191 = vpop.f32.mrb[0].mxu0
    %v192 = vadd.f32 %v89, %v191
    %193 = vmatprep.mubr.f32.mxu0 0.0
    %194 = vmatmul.mubr.f32.gmra.mrb[0].mxu0 %v100
    %v195 = vpop.f32.mrb[0].mxu0
    %v196 = vadd.f32 %v85, %v195
    %v197 = vpop.f32.mrb[0].mxu0
    %v198 = vadd.f32 %v89, %v197
    %199 = vmatprep.mubr.f32.mxu0 0.0
    %200 = vmatmul.mubr.f32.gmra.mrb[0].mxu0 %v103
    %v201 = vpop.f32.mrb[0].mxu0
    %v202 = vadd.f32 %v85, %v201
    %v203 = vpop.f32.mrb[0].mxu0
    %v204 = vadd.f32 %v89, %v203
    %205 = vmatprep.mubr.f32.mxu0 0.0
    %206 = vmatmul.mubr.f32.gmra.mrb[0].mxu0 %v106
    %v207 = vpop.f32.mrb[0].mxu0
    %v208 = vadd.f32 %v85, %v207
    %v209 = vpop.f32.mrb[0].mxu0
    %v210 = vadd.f32 %v89, %v209
    %211 = vmatprep.mubr.f32.mxu0 0.0
    %212 = vmatmul.mubr.f32.gmra.mrb[0].mxu0 %v109
    %v213 = vpop.f32.mrb[0].mxu0
    %v214 = vadd.f32 %v85, %v213
    %v215 = vpop.f32.mrb[0].mxu0
    %v216 = vadd.f32 %v89, %v215
    %217 = vmatprep.mubr.f32.mxu0 0.0
    %218 = vmatmul.mubr.f32.gmra.mrb[0].mxu0 %v112
    %v219 = vpop.f32.mrb[0].mxu0
    %v220 = vadd.f32 %v85, %v219
    %v221 = vpop.f32.mrb[0].mxu0
    %v222 = vadd.f32 %v89, %v221
    %223 = vmatprep.mubr.f32.mxu0 0.0
    %224 = vmatmul.mubr.f32.gmra.mrb[0].mxu0 %v115
    %v225 = vpop.f32.mrb[0].mxu0
    %v226 = vadd.f32 %v85, %v225
    %v227 = vpop.f32.mrb[0].mxu0
    %v228 = vadd.f32 %v89, %v227
    %229 = vdwg.mxu0
    %v230 = vmax.f32 %v184, 0.0
    %v231 = vmax.f32 %v186, 0.0
    %v232 = vmax.f32 %v190, 0.0
    %v233 = vmax.f32 %v192, 0.0
    %v234 = vmax.f32 %v196, 0.0
    %v235 = vmax.f32 %v198, 0.0
    %v236 = vmax.f32 %v202, 0.0
    %v237 = vmax.f32 %v204, 0.0
    %v238 = vmax.f32 %v208, 0.0
    %v239 = vmax.f32 %v210, 0.0
    %v240 = vmax.f32 %v214, 0.0
    %v241 = vmax.f32 %v216, 0.0
    %v242 = vmax.f32 %v220, 0.0
    %v243 = vmax.f32 %v222, 0.0
    %v244 = vmax.f32 %v226, 0.0
    %v245 = vmax.f32 %v228, 0.0
    %s246 = smul.u32 0, 2
    %s247 = smul.addr %s246, 8
    %s248 = scalar_lea.vmem [#allocation2], %s247
    %249 = vst [vmem:[%s248] sm:$0xff] %v230
    %250 = vst [vmem:[%s248 + $0x8] sm:$0xff] %v231
    %251 = vst [vmem:[%s248 + $0x10] sm:$0xff] %v232
    %252 = vst [vmem:[%s248 + $0x18] sm:$0xff] %v233
    %253 = vst [vmem:[%s248 + $0x20] sm:$0xff] %v234
    %254 = vst [vmem:[%s248 + $0x28] sm:$0xff] %v235
    %255 = vst [vmem:[%s248 + $0x30] sm:$0xff] %v236
    %256 = vst [vmem:[%s248 + $0x38] sm:$0xff] %v237
    %257 = vst [vmem:[%s248 + $0x40] sm:$0xff] %v238
    %258 = vst [vmem:[%s248 + $0x48] sm:$0xff] %v239
    %259 = vst [vmem:[%s248 + $0x50] sm:$0xff] %v240
    %260 = vst [vmem:[%s248 + $0x58] sm:$0xff] %v241
    %261 = vst [vmem:[%s248 + $0x60] sm:$0xff] %v242
    %262 = vst [vmem:[%s248 + $0x68] sm:$0xff] %v243
    %263 = vst [vmem:[%s248 + $0x70] sm:$0xff] %v244
    %264 = vst [vmem:[%s248 + $0x78] sm:$0xff] %v245
    %v265 = vld [vmem:[%s4] sm:$0x1]
    %v267 = vlaneseq
    %v268 = vshrl.u32 %v267, 7
    %v269 = vsub.s32 0, %v268
    %v270 = vrot.slane %v265, %v269
    %v272 = vld [vmem:[%s5] sm:$0x1]
    %v274 = vlaneseq
    %v275 = vshrl.u32 %v274, 7
    %v276 = vsub.s32 0, %v275
    %v277 = vrot.slane %v272, %v276
    %v279 = vld [vmem:[%s1] sm:$0xff]
    %280 = vset.pattern.permute.xlu0 0
    %281 = vperm.xlu0 %280, %v279
    %v282 = vpop.permute.xlu0 %281
    %s283 = smul.u32 0, 2
    %s284 = smul.addr %s283, 8
    %s285 = scalar_lea.vmem [#allocation2], %s284
    %v286 = vld [vmem:[%s285] sm:$0xff]
    %v287 = vld [vmem:[%s285 + $0x8] sm:$0xff]
    %v288 = vmul.f32 %v277, %v270
    %289 = vrot.lane.b32.xlu0 %v288, 1
    %v290 = vpop.permute.xlu0 %289
    %v291 = vmax.f32 %v277, %v290
    %v292 = vmul.f32 %v291, %v287
    %293 = vrot.lane.b32.xlu0 %v292, 1
    %v294 = vpop.permute.xlu0 %293
    %v295 = vadd.f32 %v294, %v277
    %v296 = vmul.f32 %v291, %v286
    %v297 = vmax.f32 %v295, %v296
    %vm298 = vcmp.gt.s32.totalorder %v282, 0
    %v299 = vsel %vm298, %v297, 0.0
    %v300 = vmax.f32 %v299, 0.0
    %s301 = smul.u32 1, 2
    %s302 = smul.addr %s301, 8
    %s303 = scalar_lea.vmem [#allocation2], %s302
    %v304 = vld [vmem:[%s303] sm:$0xff]
    %v305 = vld [vmem:[%s303 + $0x8] sm:$0xff]
    %v306 = vmul.f32 %v297, %v270
    %307 = vrot.lane.b32.xlu0 %v306, 1
    %v308 = vpop.permute.xlu0 %307
    %v309 = vmax.f32 %v297, %v308
    %v310 = vmul.f32 %v309, %v305
    %311 = vrot.lane.b32.xlu0 %v310, 1
    %v312 = vpop.permute.xlu0 %311
    %v313 = vadd.f32 %v312, %v277
    %v314 = vmul.f32 %v309, %v304
    %v315 = vmax.f32 %v313, %v314
    %vm316 = vcmp.gt.s32.totalorder %v282, 1
    %v317 = vsel %vm316, %v315, 0.0
    %v318 = vmax.f32 %v300, %v317
    %s319 = smul.u32 2, 2
    %s320 = smul.addr %s319, 8
    %s321 = scalar_lea.vmem [#allocation2], %s320
    %v322 = vld [vmem:[%s321] sm:$0xff]
    %v323 = vld [vmem:[%s321 + $0x8] sm:$0xff]
    %v324 = vmul.f32 %v315, %v270
    %325 = vrot.lane.b32.xlu0 %v324, 1
    %v326 = vpop.permute.xlu0 %325
    %v327 = vmax.f32 %v315, %v326
    %v328 = vmul.f32 %v327, %v323
    %329 = vrot.lane.b32.xlu0 %v328, 1
    %v330 = vpop.permute.xlu0 %329
    %v331 = vadd.f32 %v330, %v277
    %v332 = vmul.f32 %v327, %v322
    %v333 = vmax.f32 %v331, %v332
    %vm334 = vcmp.gt.s32.totalorder %v282, 2
    %v335 = vsel %vm334, %v333, 0.0
    %v336 = vmax.f32 %v318, %v335
    %s337 = smul.u32 3, 2
    %s338 = smul.addr %s337, 8
    %s339 = scalar_lea.vmem [#allocation2], %s338
    %v340 = vld [vmem:[%s339] sm:$0xff]
    %v341 = vld [vmem:[%s339 + $0x8] sm:$0xff]
    %v342 = vmul.f32 %v333, %v270
    %343 = vrot.lane.b32.xlu0 %v342, 1
    %v344 = vpop.permute.xlu0 %343
    %v345 = vmax.f32 %v333, %v344
    %v346 = vmul.f32 %v345, %v341
    %347 = vrot.lane.b32.xlu0 %v346, 1
    %v348 = vpop.permute.xlu0 %347
    %v349 = vadd.f32 %v348, %v277
    %v350 = vmul.f32 %v345, %v340
    %v351 = vmax.f32 %v349, %v350
    %vm352 = vcmp.gt.s32.totalorder %v282, 3
    %v353 = vsel %vm352, %v351, 0.0
    %v354 = vmax.f32 %v336, %v353
    %s355 = smul.u32 4, 2
    %s356 = smul.addr %s355, 8
    %s357 = scalar_lea.vmem [#allocation2], %s356
    %v358 = vld [vmem:[%s357] sm:$0xff]
    %v359 = vld [vmem:[%s357 + $0x8] sm:$0xff]
    %v360 = vmul.f32 %v351, %v270
    %361 = vrot.lane.b32.xlu0 %v360, 1
    %v362 = vpop.permute.xlu0 %361
    %v363 = vmax.f32 %v351, %v362
    %v364 = vmul.f32 %v363, %v359
    %365 = vrot.lane.b32.xlu0 %v364, 1
    %v366 = vpop.permute.xlu0 %365
    %v367 = vadd.f32 %v366, %v277
    %v368 = vmul.f32 %v363, %v358
    %v369 = vmax.f32 %v367, %v368
    %vm370 = vcmp.gt.s32.totalorder %v282, 4
    %v371 = vsel %vm370, %v369, 0.0
    %v372 = vmax.f32 %v354, %v371
    %s373 = smul.u32 5, 2
    %s374 = smul.addr %s373, 8
    %s375 = scalar_lea.vmem [#allocation2], %s374
    %v376 = vld [vmem:[%s375] sm:$0xff]
    %v377 = vld [vmem:[%s375 + $0x8] sm:$0xff]
    %v378 = vmul.f32 %v369, %v270
    %379 = vrot.lane.b32.xlu0 %v378, 1
    %v380 = vpop.permute.xlu0 %379
    %v381 = vmax.f32 %v369, %v380
    %v382 = vmul.f32 %v381, %v377
    %383 = vrot.lane.b32.xlu0 %v382, 1
    %v384 = vpop.permute.xlu0 %383
    %v385 = vadd.f32 %v384, %v277
    %v386 = vmul.f32 %v381, %v376
    %v387 = vmax.f32 %v385, %v386
    %vm388 = vcmp.gt.s32.totalorder %v282, 5
    %v389 = vsel %vm388, %v387, 0.0
    %v390 = vmax.f32 %v372, %v389
    %s391 = smul.u32 6, 2
    %s392 = smul.addr %s391, 8
    %s393 = scalar_lea.vmem [#allocation2], %s392
    %v394 = vld [vmem:[%s393] sm:$0xff]
    %v395 = vld [vmem:[%s393 + $0x8] sm:$0xff]
    %v396 = vmul.f32 %v387, %v270
    %397 = vrot.lane.b32.xlu0 %v396, 1
    %v398 = vpop.permute.xlu0 %397
    %v399 = vmax.f32 %v387, %v398
    %v400 = vmul.f32 %v399, %v395
    %401 = vrot.lane.b32.xlu0 %v400, 1
    %v402 = vpop.permute.xlu0 %401
    %v403 = vadd.f32 %v402, %v277
    %v404 = vmul.f32 %v399, %v394
    %v405 = vmax.f32 %v403, %v404
    %vm406 = vcmp.gt.s32.totalorder %v282, 6
    %v407 = vsel %vm406, %v405, 0.0
    %v408 = vmax.f32 %v390, %v407
    %s409 = smul.u32 7, 2
    %s410 = smul.addr %s409, 8
    %s411 = scalar_lea.vmem [#allocation2], %s410
    %v412 = vld [vmem:[%s411] sm:$0xff]
    %v413 = vld [vmem:[%s411 + $0x8] sm:$0xff]
    %v414 = vmul.f32 %v405, %v270
    %415 = vrot.lane.b32.xlu0 %v414, 1
    %v416 = vpop.permute.xlu0 %415
    %v417 = vmax.f32 %v405, %v416
    %v418 = vmul.f32 %v417, %v413
    %419 = vrot.lane.b32.xlu0 %v418, 1
    %v420 = vpop.permute.xlu0 %419
    %v421 = vadd.f32 %v420, %v277
    %v422 = vmul.f32 %v417, %v412
    %v423 = vmax.f32 %v421, %v422
    %vm424 = vcmp.gt.s32.totalorder %v282, 7
    %v425 = vsel %vm424, %v423, 0.0
    %v426 = vmax.f32 %v408, %v425
    %v427 = vld [vmem:[#allocation6] sm:$0xff]
    %v428 = vld [vmem:[#allocation6 + $0x8] sm:$0xff]
    %v429 = vld [vmem:[#allocation6 + $0x10] sm:$0xff]
    %v430 = vld [vmem:[#allocation6 + $0x18] sm:$0xff]
    %v431 = vld [vmem:[#allocation6 + $0x20] sm:$0xff]
    %v432 = vld [vmem:[#allocation6 + $0x28] sm:$0xff]
    %v433 = vld [vmem:[#allocation6 + $0x30] sm:$0xff]
    %v434 = vld [vmem:[#allocation6 + $0x38] sm:$0xff]
    %v435 = vld [vmem:[#allocation6 + $0x40] sm:$0xff]
    %v436 = vld [vmem:[#allocation6 + $0x48] sm:$0xff]
    %v437 = vld [vmem:[#allocation6 + $0x50] sm:$0xff]
    %v438 = vld [vmem:[#allocation6 + $0x58] sm:$0xff]
    %v439 = vld [vmem:[#allocation6 + $0x60] sm:$0xff]
    %v440 = vld [vmem:[#allocation6 + $0x68] sm:$0xff]
    %v441 = vld [vmem:[#allocation6 + $0x70] sm:$0xff]
    %v442 = vld [vmem:[#allocation6 + $0x78] sm:$0xff]
    %v443 = vld [vmem:[%s7] sm:$0x1]
    %v445 = vlaneseq
    %v446 = vshrl.u32 %v445, 7
    %v447 = vsub.s32 0, %v446
    %v448 = vrot.slane %v443, %v447
    %450 = vmatprep.subr.mxu0 0.0
    %451 = vmatpush1.msra.mxu0 %v427
    %452 = vmatprep.subr.mxu0 0.0
    %453 = vmatpush1.msra.mxu0 %v428
    %454 = vmatprep.subr.mxu0 0.0
    %455 = vmatpush1.msra.mxu0 %v429
    %456 = vmatprep.subr.mxu0 0.0
    %457 = vmatpush1.msra.mxu0 %v430
    %458 = vmatprep.subr.mxu0 0.0
    %459 = vmatpush1.msra.mxu0 %v431
    %460 = vmatprep.subr.mxu0 0.0
    %461 = vmatpush1.msra.mxu0 %v432
    %462 = vmatprep.subr.mxu0 0.0
    %463 = vmatpush1.msra.mxu0 %v433
    %464 = vmatprep.subr.mxu0 0.0
    %465 = vmatpush1.msra.mxu0 %v434
    %466 = vmatprep.subr.mxu0 0.0
    %467 = vmatpush1.msra.mxu0 %v435
    %468 = vmatprep.subr.mxu0 0.0
    %469 = vmatpush1.msra.mxu0 %v436
    %470 = vmatprep.subr.mxu0 0.0
    %471 = vmatpush1.msra.mxu0 %v437
    %472 = vmatprep.subr.mxu0 0.0
    %473 = vmatpush1.msra.mxu0 %v438
    %474 = vmatprep.subr.mxu0 0.0
    %475 = vmatpush1.msra.mxu0 %v439
    %476 = vmatprep.subr.mxu0 0.0
    %477 = vmatpush1.msra.mxu0 %v440
    %478 = vmatprep.subr.mxu0 0.0
    %479 = vmatpush1.msra.mxu0 %v441
    %480 = vmatprep.subr.mxu0 0.0
    %481 = vmatpush1.msra.mxu0 %v442
    %482 = vmatprep.subr.mxu0 0.0
    %483 = vmatpush1.msra.mxu0 0.0
    %484 = vmatprep.subr.mxu0 0.0
    %485 = vmatpush1.msra.mxu0 0.0
    %486 = vmatprep.subr.mxu0 0.0
    %487 = vmatpush1.msra.mxu0 0.0
    %488 = vmatprep.subr.mxu0 0.0
    %489 = vmatpush1.msra.mxu0 0.0
    %490 = vmatprep.subr.mxu0 0.0
    %491 = vmatpush1.msra.mxu0 0.0
    %492 = vmatprep.subr.mxu0 0.0
    %493 = vmatpush1.msra.mxu0 0.0
    %494 = vmatprep.subr.mxu0 0.0
    %495 = vmatpush1.msra.mxu0 0.0
    %496 = vmatprep.subr.mxu0 0.0
    %497 = vmatpush1.msra.mxu0 0.0
    %498 = vmatprep.subr.mxu0 0.0
    %499 = vmatpush1.msra.mxu0 0.0
    %500 = vmatprep.subr.mxu0 0.0
    %501 = vmatpush1.msra.mxu0 0.0
    %502 = vmatprep.subr.mxu0 0.0
    %503 = vmatpush1.msra.mxu0 0.0
    %504 = vmatprep.subr.mxu0 0.0
    %505 = vmatpush1.msra.mxu0 0.0
    %506 = vmatprep.subr.mxu0 0.0
    %507 = vmatpush1.msra.mxu0 0.0
    %508 = vmatprep.subr.mxu0 0.0
    %509 = vmatpush1.msra.mxu0 0.0
    %510 = vmatprep.subr.mxu0 0.0
    %511 = vmatpush1.msra.mxu0 0.0
    %512 = vmatprep.subr.mxu0 0.0
    %513 = vmatpush1.msra.mxu0 0.0
    %514 = vmatprep.mubr.f32.mxu0 0.0
    %515 = vmatmul.mubr.f32.gmra.mrb[0].mxu0 %v426
    %v516 = vpop.f32.mrb[0].mxu0
    %v517 = vadd.f32 %v448, %v516
    %v518 = vpop.f32.mrb[0].mxu0
    %519 = vdwg.mxu0
    %v520 = vmax.f32 %v517, 0.0
    %v521 = vld [vmem:[%s8] sm:$0xff]
    %v522 = vld [vmem:[%s8 + $0x8] sm:$0xff]
    %v523 = vld [vmem:[%s8 + $0x10] sm:$0xff]
    %v524 = vld [vmem:[%s8 + $0x18] sm:$0xff]
    %v525 = vld [vmem:[%s8 + $0x20] sm:$0xff]
    %v526 = vld [vmem:[%s8 + $0x28] sm:$0xff]
    %v527 = vld [vmem:[%s8 + $0x30] sm:$0xff]
    %v528 = vld [vmem:[%s8 + $0x38] sm:$0xff]
    %v529 = vld [vmem:[%s8 + $0x40] sm:$0xff]
    %v530 = vld [vmem:[%s8 + $0x48] sm:$0xff]
    %v531 = vld [vmem:[%s8 + $0x50] sm:$0xff]
    %v532 = vld [vmem:[%s8 + $0x58] sm:$0xff]
    %v533 = vld [vmem:[%s8 + $0x60] sm:$0xff]
    %v534 = vld [vmem:[%s8 + $0x68] sm:$0xff]
    %v535 = vld [vmem:[%s8 + $0x70] sm:$0xff]
    %v536 = vld [vmem:[%s8 + $0x78] sm:$0xff]
    %v537 = vld [vmem:[%s9] sm:$0x1]
    %v539 = vlaneseq
    %v540 = vshrl.u32 %v539, 7
    %v541 = vsub.s32 0, %v540
    %v542 = vrot.slane %v537, %v541
    %544 = vmatprep.subr.mxu0 0.0
    %545 = vmatpush1.msra.mxu0 %v521
    %546 = vmatprep.subr.mxu0 0.0
    %547 = vmatpush1.msra.mxu0 %v522
    %548 = vmatprep.subr.mxu0 0.0
    %549 = vmatpush1.msra.mxu0 %v523
    %550 = vmatprep.subr.mxu0 0.0
    %551 = vmatpush1.msra.mxu0 %v524
    %552 = vmatprep.subr.mxu0 0.0
    %553 = vmatpush1.msra.mxu0 %v525
    %554 = vmatprep.subr.mxu0 0.0
    %555 = vmatpush1.msra.mxu0 %v526
    %556 = vmatprep.subr.mxu0 0.0
    %557 = vmatpush1.msra.mxu0 %v527
    %558 = vmatprep.subr.mxu0 0.0
    %559 = vmatpush1.msra.mxu0 %v528
    %560 = vmatprep.subr.mxu0 0.0
    %561 = vmatpush1.msra.mxu0 %v529
    %562 = vmatprep.subr.mxu0 0.0
    %563 = vmatpush1.msra.mxu0 %v530
    %564 = vmatprep.subr.mxu0 0.0
    %565 = vmatpush1.msra.mxu0 %v531
    %566 = vmatprep.subr.mxu0 0.0
    %567 = vmatpush1.msra.mxu0 %v532
    %568 = vmatprep.subr.mxu0 0.0
    %569 = vmatpush1.msra.mxu0 %v533
    %570 = vmatprep.subr.mxu0 0.0
    %571 = vmatpush1.msra.mxu0 %v534
    %572 = vmatprep.subr.mxu0 0.0
    %573 = vmatpush1.msra.mxu0 %v535
    %574 = vmatprep.subr.mxu0 0.0
    %575 = vmatpush1.msra.mxu0 %v536
    %576 = vmatprep.subr.mxu0 0.0
    %577 = vmatpush1.msra.mxu0 0.0
    %578 = vmatprep.subr.mxu0 0.0
    %579 = vmatpush1.msra.mxu0 0.0
    %580 = vmatprep.subr.mxu0 0.0
    %581 = vmatpush1.msra.mxu0 0.0
    %582 = vmatprep.subr.mxu0 0.0
    %583 = vmatpush1.msra.mxu0 0.0
    %584 = vmatprep.subr.mxu0 0.0
    %585 = vmatpush1.msra.mxu0 0.0
    %586 = vmatprep.subr.mxu0 0.0
    %587 = vmatpush1.msra.mxu0 0.0
    %588 = vmatprep.subr.mxu0 0.0
    %589 = vmatpush1.msra.mxu0 0.0
    %590 = vmatprep.subr.mxu0 0.0
    %591 = vmatpush1.msra.mxu0 0.0
    %592 = vmatprep.subr.mxu0 0.0
    %593 = vmatpush1.msra.mxu0 0.0
    %594 = vmatprep.subr.mxu0 0.0
    %595 = vmatpush1.msra.mxu0 0.0
    %596 = vmatprep.subr.mxu0 0.0
    %597 = vmatpush1.msra.mxu0 0.0
    %598 = vmatprep.subr.mxu0 0.0
    %599 = vmatpush1.msra.mxu0 0.0
    %600 = vmatprep.subr.mxu0 0.0
    %601 = vmatpush1.msra.mxu0 0.0
    %602 = vmatprep.subr.mxu0 0.0
    %603 = vmatpush1.msra.mxu0 0.0
    %604 = vmatprep.subr.mxu0 0.0
    %605 = vmatpush1.msra.mxu0 0.0
    %606 = vmatprep.subr.mxu0 0.0
    %607 = vmatpush1.msra.mxu0 0.0
    %608 = vmatprep.mubr.f32.mxu0 0.0
    %609 = vmatmul.mubr.f32.gmra.mrb[0].mxu0 %v520
    %v610 = vpop.f32.mrb[0].mxu0
    %v611 = vadd.f32 %v542, %v610
    %v612 = vpop.f32.mrb[0].mxu0
    %613 = vdwg.mxu0
    %614 = vst [vmem:[#allocation8] sm:$0xff] %v611
    // Predicated region
    $region50: #{tpu_custom_call.1} parent=1 // pred_check
      _
    $region51: #{tpu_custom_call.1} parent=1 // pred_check_branch
      %616 = sbr.rel (0) target = $region53
    $region52: #{tpu_custom_call.1} parent=1 // pred_region
      %s618 = ssub.s32 128, 128
      %619 = vsyncadd [#allocation5], %s618
      %s621 = sshll.u32 [#allocation8], 4
      %s622 = int_to_ptr.vmem [resolvable:$true] %s621
      %624 = dma.vmem_to_hbm [thread:$0]  %s622, 128, %s10, [#allocation5]
    $region53: #{tpu_custom_call.1} parent=1 // pred_fallthru
      _
    // Predicated region
    $region54: #{tpu_custom_call.1} parent=1 // pred_check
      _
    $region55: #{tpu_custom_call.1} parent=1 // pred_check_branch
      %626 = sbr.rel (0) target = $region57
    $region56: #{tpu_custom_call.1} parent=1 // pred_region
      %627 = dma.done [#allocation5], 128
    $region57: #{tpu_custom_call.1} parent=1 // pred_fallthru
      _
    %628 = vsyncpa [#allocation4], 1
    %629 = vsyncpa [#allocation7], 1
    %630 = vsyncpa [#allocation5], 1

</llo_original>
